<compile_context>
chip_gen: v7x
topology: tpu7x:2x2x1
jax: 0.10.0
libtpu: 0.0.40
codegen_flags: <defaults>
</compile_context>

<pallas_src>
import math
import jax
import jax.numpy as jnp
from jax.experimental import pallas as pl
from jax.experimental.pallas import tpu as pltpu


def _round_up(n, m):
    return ((n + m - 1) // m) * m


def _pad_to(a, axis, target):
    pad = target - a.shape[axis]
    if pad <= 0:
        return a
    widths = [(0, 0)] * a.ndim
    widths[axis] = (0, pad)
    return jnp.pad(a, widths)


def _vmem_capacity_bytes():
    try:
        info = pltpu.get_tpu_info()
        cap = getattr(info, "vmem_capacity_bytes", None)
        if cap:
            return int(cap)
    except Exception:
        pass
    return 64 * 1024 * 1024  # conservative: v7x per-TensorCore VMEM


def _make_highway_kernel(n_chunks, hidden_p):
    def kernel(*refs):
        x_refs = refs[:n_chunks]
        w_refs = refs[n_chunks:2 * n_chunks]
        btra_ref, wext_ref, bext_ref, o_ref = refs[2 * n_chunks:]

        # h = relu(sum_i x_i @ W_tra_i + b_tra)   (concat folded into the kernel)
        acc = jnp.dot(x_refs[0][...], w_refs[0][...],
                      preferred_element_type=jnp.float32)
        for i in range(1, n_chunks):
            acc = acc + jnp.dot(x_refs[i][...], w_refs[i][...],
                                preferred_element_type=jnp.float32)
        h = jnp.maximum(acc + btra_ref[...], 0.0)              # (tm, Hp) f32

        # One MXU pass gives both the tanh pre-activation and the gate logit:
        # W_ext = [ W_h | w_t in lane 0 of an extra 128-lane block, rest zero ].
        gt = jnp.dot(h.astype(wext_ref.dtype), wext_ref[...],
                     preferred_element_type=jnp.float32) + bext_ref[...]
        g = jnp.tanh(gt[:, :hidden_p])                         # (tm, Hp)
        # Extra block: only lane 0 nonzero -> lane-reduce == h @ w_t + b_t exactly.
        t_logit = jnp.sum(gt[:, hidden_p:], axis=-1, keepdims=True)
        t = jax.nn.sigmoid(t_logit)                            # (tm, 1)

        o_ref[...] = (t * g + (1.0 - t) * h).astype(o_ref.dtype)

    return kernel


def highway_forward(inputs, params, *, tm=None, matmul_dtype=None):
    """inputs: list/tuple of arrays concatenated on the last axis (torch.cat(x, -1)).
    params store Linear weights transposed vs. PyTorch: (in_features, out_features).
    matmul_dtype: e.g. jnp.bfloat16 runs the MXU in bf16 with f32 accumulation
    (full-rate and safe on v5e, v6e and v7x; elementwise math stays f32)."""
    inputs = list(inputs)
    lead_shape = inputs[0].shape[:-1]
    in_sizes = [int(x.shape[-1]) for x in inputs]
    input_size = sum(in_sizes)
    hidden_size = int(params["w_tra"].shape[1])
    hidden_p = _round_up(hidden_size, 128)     # lane-dense output / weights
    hext = hidden_p + 128                      # extra 128-lane block for w_t
    out_dtype = inputs[0].dtype
    w_dtype = matmul_dtype if matmul_dtype is not None else params["w_tra"].dtype
    x_dtype = matmul_dtype if matmul_dtype is not None else inputs[0].dtype

    # ---- activations: flatten leading dims. Keep chunks separate only when
    # they are already lane-aligned; otherwise concat once on the host so the
    # first matmul is one dense full-K MXU pass with one DMA stream.
    xs2d = [x.reshape(-1, s) for x, s in zip(inputs, in_sizes)]
    if len(xs2d) > 1 and not all(s % 128 == 0 for s in in_sizes):
        xs2d = [jnp.concatenate(xs2d, axis=-1)]
        chunk_sizes = [input_size]
    else:
        chunk_sizes = in_sizes
    n_chunks = len(xs2d)
    n_rows = xs2d[0].shape[0]

    # ---- weights (one-time prep; zero padding keeps the math exact).
    w_tra = params["w_tra"].astype(w_dtype)
    w_chunks, off = [], 0
    for s in chunk_sizes:
        w_chunks.append(_pad_to(w_tra[off:off + s, :], 1, hidden_p))
        off += s
    b_tra = _pad_to(params["b_tra"].reshape(1, hidden_size).astype(jnp.float32),
                    1, hidden_p)

    w_ext = jnp.zeros((hidden_p, hext), w_dtype)
    w_ext = w_ext.at[:hidden_size, :hidden_size].set(params["w_h"].astype(w_dtype))
    w_ext = w_ext.at[:hidden_size, hidden_p].set(
        params["w_t"].reshape(hidden_size).astype(w_dtype))
    b_ext = jnp.zeros((1, hext), jnp.float32)
    b_ext = b_ext.at[0, :hidden_size].set(
        params["b_h"].reshape(hidden_size).astype(jnp.float32))
    b_ext = b_ext.at[0, hidden_p].set(params["b_t"].reshape(()).astype(jnp.float32))

    if matmul_dtype is not None:
        xs2d = [x.astype(matmul_dtype) for x in xs2d]

    x_itemsize = jnp.dtype(x_dtype).itemsize
    out_itemsize = jnp.dtype(out_dtype).itemsize
    weight_bytes = sum(int(w.size) * jnp.dtype(w.dtype).itemsize
                       for w in w_chunks + [b_tra, w_ext, b_ext])
    pack = 16 if x_itemsize < 4 else 8          # sublane packing of matmul dtype

    def vmem_estimate(tm_, wbuf):
        act = 2 * tm_ * input_size * x_itemsize + 2 * tm_ * hidden_p * out_itemsize
        temps = 5 * tm_ * hext * 4              # f32 h / gt / g / t / mix
        return act + wbuf * weight_bytes + temps

    vmem_cap = _vmem_capacity_bytes()
    budget = (vmem_cap * 3) // 4                # headroom for compiler scratch

    # ---- row tile: big (512 / 1024) by default, VMEM-budgeted, and split so the
    # row grid has >= 2 steps when rows allow (megacore sharding on v7x).
    tm0 = tm if tm is not None else (1024 if hidden_p <= 512 else 512)
    tm_ = _round_up(min(tm0, max(n_rows, 1)), pack)
    if _round_up(n_rows, tm_) // tm_ < 2 and n_rows >= 256:
        tm_ = _round_up(-(-n_rows // 2), pack)
    while tm_ > pack and vmem_estimate(tm_, 1) > budget:
        tm_ = _round_up(tm_ // 2, pack)
    tm = tm_
    rows_p = _round_up(n_rows, tm)
    if rows_p != n_rows:                        # pad only when a ragged tail exists
        xs2d = [_pad_to(x, 0, rows_p) for x in xs2d]

    grid = (rows_p // tm,)
    operands = xs2d + w_chunks + [b_tra, w_ext, b_ext]

    cost = pl.CostEstimate(
        flops=int(2 * rows_p * hidden_p * input_size + 2 * rows_p * hext * hidden_p),
        transcendentals=int(rows_p * (hidden_p + 1)),
        bytes_accessed=int(rows_p * input_size * x_itemsize + weight_bytes
                           + rows_p * hidden_p * out_itemsize),
    )

    def run(use_buffered):
        def const_spec(shape):
            idx = lambda i: (0,) * len(shape)
            if use_buffered:
                # Constant index map -> single buffer: no point double-buffering
                # weights that never change across the grid.
                return pl.BlockSpec(shape, idx, pipeline_mode=pl.Buffered(1))
            return pl.BlockSpec(shape, idx)

        in_specs = (
            [pl.BlockSpec((tm, s), lambda i: (i, 0)) for s in chunk_sizes]   # x chunks
            + [const_spec((s, hidden_p)) for s in chunk_sizes]               # W_tra chunks
            + [const_spec((1, hidden_p)),                                    # b_tra
               const_spec((hidden_p, hext)),                                 # [W_h | w_t]
               const_spec((1, hext))]                                        # [b_h | b_t]
        )
        out_specs = pl.BlockSpec((tm, hidden_p), lambda i: (i, 0))

        est = vmem_estimate(tm, 1 if use_buffered else 2)
        ckw = dict(dimension_semantics=("parallel",))     # rows shard across TCs
        if est * 5 // 4 > 16 * 1024 * 1024:
            # Raise the scoped limit only when needed and never above the chip.
            ckw["vmem_limit_bytes"] = int(min(max(est * 5 // 4, 32 * 1024 * 1024),
                                              vmem_cap - 4 * 1024 * 1024))

        return pl.pallas_call(
            _make_highway_kernel(n_chunks, hidden_p),
            out_shape=jax.ShapeDtypeStruct((rows_p, hidden_p), out_dtype),
            grid_spec=pltpu.PrefetchScalarGridSpec(
                num_scalar_prefetch=0,
                grid=grid,
                in_specs=in_specs,
                out_specs=out_specs),
            compiler_params=pltpu.CompilerParams(**ckw),
            cost_estimate=cost,
        )(*operands)

    try:
        out2d = run(True)
    except Exception:
        out2d = run(False)   # installed Pallas without pipeline_mode / Buffered(1)

    if rows_p != n_rows or hidden_p != hidden_size:
        out2d = out2d[:n_rows, :hidden_size]
    return out2d.reshape(*lead_shape, hidden_size)


def _xavier_uniform(key, fan_in, fan_out, dtype=jnp.float32):
    limit = math.sqrt(6.0 / (fan_in + fan_out))
    return jax.random.uniform(key, (fan_in, fan_out), dtype,
                              minval=-limit, maxval=limit)


def init_highway_params(key, input_size, hidden_size):
    k1, k2, k3 = jax.random.split(key, 3)
    return {
        # stored as (in_features, out_features) = transposed PyTorch layout
        "w_tra": _xavier_uniform(k1, input_size, hidden_size),
        "b_tra": jnp.zeros((1, hidden_size), jnp.float32),
        "w_h": _xavier_uniform(k2, hidden_size, hidden_size),
        "b_h": jnp.zeros((1, hidden_size), jnp.float32),
        "w_t": _xavier_uniform(k3, hidden_size, 1),
        "b_t": jnp.zeros((1, 1), jnp.float32),
    }


def highway_reference(inputs, params):
    """Pure-JAX reference, mirrors the PyTorch forward."""
    x = jnp.concatenate(inputs, axis=-1)
    h = jax.nn.relu(x @ params["w_tra"] + params["b_tra"].reshape(-1))
    t = jax.nn.sigmoid(h @ params["w_t"] + params["b_t"].reshape(-1))
    return t * jnp.tanh(h @ params["w_h"] + params["b_h"].reshape(-1)) + (1.0 - t) * h


if __name__ == "__main__":
    key = jax.random.PRNGKey(0)
    k_in1, k_in2, k_param = jax.random.split(key, 3)

    batch, seq = 2, 8
    input_size, hidden_size = 32, 32

    # forward's torch.cat(x, -1) implies a list of inputs concatenated on -1
    x1 = jax.random.normal(k_in1, (batch, seq, input_size // 2), jnp.float32)
    x2 = jax.random.normal(k_in2, (batch, seq, input_size // 2), jnp.float32)
    inputs = [x1, x2]

    params = init_highway_params(k_param, input_size, hidden_size)
    z_ref = highway_reference(inputs, params)

    # f32 path (exact)
    z = jax.block_until_ready(highway_forward(inputs, params))
    assert z.shape == (batch, seq, hidden_size)
    assert jnp.allclose(z, z_ref, atol=1e-5, rtol=1e-5)

    # bf16-matmul path (valid on v5e/v6e/v7x), f32 accumulation / elementwise math
    z_bf16 = jax.block_until_ready(
        highway_forward(inputs, params, matmul_dtype=jnp.bfloat16))
    assert z_bf16.shape == (batch, seq, hidden_size)
    assert jnp.allclose(z_bf16, z_ref, atol=1e-1, rtol=1e-1)

    print("KERNEL_OK")
</pallas_src>

<mosaic_0001>
module attributes {stable_mosaic.version = 11 : i64} {
  func.func @kernel(%arg0: i32, %arg1: memref<16x32xf32, #tpu.memory_space<vmem>>, %arg2: memref<32x128xf32, #tpu.memory_space<vmem>>, %arg3: memref<1x128xf32, #tpu.memory_space<vmem>>, %arg4: memref<128x256xf32, #tpu.memory_space<vmem>>, %arg5: memref<1x256xf32, #tpu.memory_space<vmem>>, %arg6: memref<16x128xf32, #tpu.memory_space<vmem>>) attributes {dimension_semantics = [#tpu.dimension_semantics<parallel>], iteration_bounds = array<i64: 1>, scalar_prefetch = 0 : i64, scratch_operands = 0 : i64, tpu.core_type = #tpu.core_type<tc>, window_params = [{transform_indices = @transform_0, window_bounds = array<i64: 16, 32>}, {pipeline_mode = #tpu.pipeline_mode<synchronous>, transform_indices = @transform_1, window_bounds = array<i64: 32, 128>}, {pipeline_mode = #tpu.pipeline_mode<synchronous>, transform_indices = @transform_2, window_bounds = array<i64: 1, 128>}, {pipeline_mode = #tpu.pipeline_mode<synchronous>, transform_indices = @transform_3, window_bounds = array<i64: 128, 256>}, {pipeline_mode = #tpu.pipeline_mode<synchronous>, transform_indices = @transform_4, window_bounds = array<i64: 1, 256>}, {transform_indices = @transform_5, window_bounds = array<i64: 16, 128>}]} {
    %c0 = arith.constant 0 : index
    %c0_0 = arith.constant 0 : index
    %0 = vector.load %arg1[%c0, %c0_0] : memref<16x32xf32, #tpu.memory_space<vmem>>, vector<16x32xf32>
    %c0_1 = arith.constant 0 : index
    %c0_2 = arith.constant 0 : index
    %1 = vector.load %arg2[%c0_1, %c0_2] : memref<32x128xf32, #tpu.memory_space<vmem>>, vector<32x128xf32>
    %cst = arith.constant dense<0.000000e+00> : vector<16x128xf32>
    %2 = tpu.matmul %0, %1, %cst {dimension_numbers = #tpu.dot_dimension_numbers<[1], [0], [0], [1], [0, 0, 1, 1], [], []>} : vector<16x32xf32>, vector<32x128xf32>, vector<16x128xf32> -> vector<16x128xf32>
    %c0_3 = arith.constant 0 : index
    %c0_4 = arith.constant 0 : index
    %3 = vector.load %arg3[%c0_3, %c0_4] : memref<1x128xf32, #tpu.memory_space<vmem>>, vector<1x128xf32>
    %4 = vector.broadcast %3 : vector<1x128xf32> to vector<16x128xf32>
    %5 = arith.addf %2, %4 : vector<16x128xf32>
    %cst_5 = arith.constant 0.000000e+00 : f32
    %6 = vector.broadcast %cst_5 : f32 to vector<16x128xf32>
    %7 = arith.maximumf %5, %6 : vector<16x128xf32>
    %c0_6 = arith.constant 0 : index
    %c0_7 = arith.constant 0 : index
    %8 = vector.load %arg4[%c0_6, %c0_7] : memref<128x256xf32, #tpu.memory_space<vmem>>, vector<128x256xf32>
    %cst_8 = arith.constant dense<0.000000e+00> : vector<16x256xf32>
    %9 = tpu.matmul %7, %8, %cst_8 {dimension_numbers = #tpu.dot_dimension_numbers<[1], [0], [0], [1], [0, 0, 1, 1], [], []>} : vector<16x128xf32>, vector<128x256xf32>, vector<16x256xf32> -> vector<16x256xf32>
    %c0_9 = arith.constant 0 : index
    %c0_10 = arith.constant 0 : index
    %10 = vector.load %arg5[%c0_9, %c0_10] : memref<1x256xf32, #tpu.memory_space<vmem>>, vector<1x256xf32>
    %11 = vector.broadcast %10 : vector<1x256xf32> to vector<16x256xf32>
    %12 = arith.addf %9, %11 : vector<16x256xf32>
    %13 = vector.extract_strided_slice %12 {offsets = [0, 0], sizes = [16, 128], strides = [1, 1]} : vector<16x256xf32> to vector<16x128xf32>
    %14 = math.tanh %13 : vector<16x128xf32>
    %15 = vector.extract_strided_slice %12 {offsets = [0, 128], sizes = [16, 128], strides = [1, 1]} : vector<16x256xf32> to vector<16x128xf32>
    %cst_11 = arith.constant dense<0.000000e+00> : vector<16xf32>
    %16 = vector.multi_reduction <add>, %15, %cst_11 [1] : vector<16x128xf32> to vector<16xf32>
    %17 = vector.shape_cast %16 : vector<16xf32> to vector<16x1xf32>
    %18 = arith.negf %17 : vector<16x1xf32>
    %19 = math.exp %18 : vector<16x1xf32>
    %cst_12 = arith.constant 1.000000e+00 : f32
    %20 = vector.broadcast %cst_12 : f32 to vector<16x1xf32>
    %21 = arith.addf %20, %19 : vector<16x1xf32>
    %22 = arith.divf %20, %21 : vector<16x1xf32>
    %23 = vector.broadcast %22 : vector<16x1xf32> to vector<16x128xf32>
    %24 = arith.mulf %23, %14 : vector<16x128xf32>
    %cst_13 = arith.constant 1.000000e+00 : f32
    %25 = vector.broadcast %cst_13 : f32 to vector<16x1xf32>
    %26 = arith.subf %25, %22 : vector<16x1xf32>
    %27 = vector.broadcast %26 : vector<16x1xf32> to vector<16x128xf32>
    %28 = arith.mulf %27, %7 : vector<16x128xf32>
    %29 = arith.addf %24, %28 : vector<16x128xf32>
    %c0_14 = arith.constant 0 : index
    %c0_15 = arith.constant 0 : index
    %30 = vector.load %arg6[%c0_14, %c0_15] : memref<16x128xf32, #tpu.memory_space<vmem>>, vector<16x128xf32>
    tpu.vector_store %arg6[%c0_14, %c0_15], %29 {strides = array<i32>} : memref<16x128xf32, #tpu.memory_space<vmem>>, vector<16x128xf32>,
    return
  }
  func.func @transform_0(%arg0: i32) -> (i32, i32) {
    %c0_i32 = arith.constant 0 : i32
    %c0_i32_0 = arith.constant 0 : i32
    return %arg0, %c0_i32 : i32, i32
  }
  func.func @transform_1(%arg0: i32) -> (i32, i32) {
    %c0_i32 = arith.constant 0 : i32
    %c0_i32_0 = arith.constant 0 : i32
    %c0_i32_1 = arith.constant 0 : i32
    return %c0_i32, %c0_i32_0 : i32, i32
  }
  func.func @transform_2(%arg0: i32) -> (i32, i32) {
    %c0_i32 = arith.constant 0 : i32
    %c0_i32_0 = arith.constant 0 : i32
    %c0_i32_1 = arith.constant 0 : i32
    return %c0_i32, %c0_i32_0 : i32, i32
  }
  func.func @transform_3(%arg0: i32) -> (i32, i32) {
    %c0_i32 = arith.constant 0 : i32
    %c0_i32_0 = arith.constant 0 : i32
    %c0_i32_1 = arith.constant 0 : i32
    return %c0_i32, %c0_i32_0 : i32, i32
  }
  func.func @transform_4(%arg0: i32) -> (i32, i32) {
    %c0_i32 = arith.constant 0 : i32
    %c0_i32_0 = arith.constant 0 : i32
    %c0_i32_1 = arith.constant 0 : i32
    return %c0_i32, %c0_i32_0 : i32, i32
  }
  func.func @transform_5(%arg0: i32) -> (i32, i32) {
    %c0_i32 = arith.constant 0 : i32
    %c0_i32_0 = arith.constant 0 : i32
    return %arg0, %c0_i32 : i32, i32
  }
}

module attributes {stable_mosaic.version = 11 : i64} {
  func.func @kernel(%arg0: i32, %arg1: memref<16x32xf32, #tpu.memory_space<vmem>>, %arg2: memref<32x128xf32, #tpu.memory_space<vmem>>, %arg3: memref<1x128xf32, #tpu.memory_space<vmem>>, %arg4: memref<128x256xf32, #tpu.memory_space<vmem>>, %arg5: memref<1x256xf32, #tpu.memory_space<vmem>>, %arg6: memref<16x128xf32, #tpu.memory_space<vmem>>) attributes {dimension_semantics = [#tpu.dimension_semantics<parallel>], iteration_bounds = array<i64: 1>, scalar_prefetch = 0 : i64, scratch_operands = 0 : i64, tpu.core_type = #tpu.core_type<tc>, window_params = [{transform_indices = @transform_0, window_bounds = array<i64: 16, 32>}, {pipeline_mode = #tpu.pipeline_mode<synchronous>, transform_indices = @transform_1, window_bounds = array<i64: 32, 128>}, {pipeline_mode = #tpu.pipeline_mode<synchronous>, transform_indices = @transform_2, window_bounds = array<i64: 1, 128>}, {pipeline_mode = #tpu.pipeline_mode<synchronous>, transform_indices = @transform_3, window_bounds = array<i64: 128, 256>}, {pipeline_mode = #tpu.pipeline_mode<synchronous>, transform_indices = @transform_4, window_bounds = array<i64: 1, 256>}, {transform_indices = @transform_5, window_bounds = array<i64: 16, 128>}]} {
    %c0 = arith.constant 0 : index
    %c0_0 = arith.constant 0 : index
    %0 = vector.load %arg1[%c0, %c0_0] : memref<16x32xf32, #tpu.memory_space<vmem>>, vector<16x32xf32>
    %c0_1 = arith.constant 0 : index
    %c0_2 = arith.constant 0 : index
    %1 = vector.load %arg2[%c0_1, %c0_2] : memref<32x128xf32, #tpu.memory_space<vmem>>, vector<32x128xf32>
    %cst = arith.constant dense<0.000000e+00> : vector<16x128xf32>
    %2 = tpu.matmul %0, %1, %cst {dimension_numbers = #tpu.dot_dimension_numbers<[1], [0], [0], [1], [0, 0, 1, 1], [], []>} : vector<16x32xf32>, vector<32x128xf32>, vector<16x128xf32> -> vector<16x128xf32>
    %c0_3 = arith.constant 0 : index
    %c0_4 = arith.constant 0 : index
    %3 = vector.load %arg3[%c0_3, %c0_4] : memref<1x128xf32, #tpu.memory_space<vmem>>, vector<1x128xf32>
    %4 = vector.broadcast %3 : vector<1x128xf32> to vector<16x128xf32>
    %5 = arith.addf %2, %4 : vector<16x128xf32>
    %cst_5 = arith.constant 0.000000e+00 : f32
    %6 = vector.broadcast %cst_5 : f32 to vector<16x128xf32>
    %7 = arith.maximumf %5, %6 : vector<16x128xf32>
    %c0_6 = arith.constant 0 : index
    %c0_7 = arith.constant 0 : index
    %8 = vector.load %arg4[%c0_6, %c0_7] : memref<128x256xf32, #tpu.memory_space<vmem>>, vector<128x256xf32>
    %cst_8 = arith.constant dense<0.000000e+00> : vector<16x256xf32>
    %9 = tpu.matmul %7, %8, %cst_8 {dimension_numbers = #tpu.dot_dimension_numbers<[1], [0], [0], [1], [0, 0, 1, 1], [], []>} : vector<16x128xf32>, vector<128x256xf32>, vector<16x256xf32> -> vector<16x256xf32>
    %c0_9 = arith.constant 0 : index
    %c0_10 = arith.constant 0 : index
    %10 = vector.load %arg5[%c0_9, %c0_10] : memref<1x256xf32, #tpu.memory_space<vmem>>, vector<1x256xf32>
    %11 = vector.broadcast %10 : vector<1x256xf32> to vector<16x256xf32>
    %12 = arith.addf %9, %11 : vector<16x256xf32>
    %13 = vector.extract_strided_slice %12 {offsets = [0, 0], sizes = [16, 128], strides = [1, 1]} : vector<16x256xf32> to vector<16x128xf32>
    %14 = math.tanh %13 : vector<16x128xf32>
    %15 = vector.extract_strided_slice %12 {offsets = [0, 128], sizes = [16, 128], strides = [1, 1]} : vector<16x256xf32> to vector<16x128xf32>
    %cst_11 = arith.constant dense<0.000000e+00> : vector<16xf32>
    %16 = vector.multi_reduction <add>, %15, %cst_11 [1] : vector<16x128xf32> to vector<16xf32>
    %17 = vector.shape_cast %16 : vector<16xf32> to vector<16x1xf32>
    %18 = arith.negf %17 : vector<16x1xf32>
    %19 = math.exp %18 : vector<16x1xf32>
    %cst_12 = arith.constant 1.000000e+00 : f32
    %20 = vector.broadcast %cst_12 : f32 to vector<16x1xf32>
    %21 = arith.addf %20, %19 : vector<16x1xf32>
    %22 = arith.divf %20, %21 : vector<16x1xf32>
    %23 = vector.broadcast %22 : vector<16x1xf32> to vector<16x128xf32>
    %24 = arith.mulf %23, %14 : vector<16x128xf32>
    %cst_13 = arith.constant 1.000000e+00 : f32
    %25 = vector.broadcast %cst_13 : f32 to vector<16x1xf32>
    %26 = arith.subf %25, %22 : vector<16x1xf32>
    %27 = vector.broadcast %26 : vector<16x1xf32> to vector<16x128xf32>
    %28 = arith.mulf %27, %7 : vector<16x128xf32>
    %29 = arith.addf %24, %28 : vector<16x128xf32>
    %c0_14 = arith.constant 0 : index
    %c0_15 = arith.constant 0 : index
    %30 = vector.load %arg6[%c0_14, %c0_15] : memref<16x128xf32, #tpu.memory_space<vmem>>, vector<16x128xf32>
    tpu.vector_store %arg6[%c0_14, %c0_15], %29 {strides = array<i32>} : memref<16x128xf32, #tpu.memory_space<vmem>>, vector<16x128xf32>,
    return
  }
  func.func @transform_0(%arg0: i32) -> (i32, i32) {
    %c0_i32 = arith.constant 0 : i32
    %c0_i32_0 = arith.constant 0 : i32
    return %arg0, %c0_i32 : i32, i32
  }
  func.func @transform_1(%arg0: i32) -> (i32, i32) {
    %c0_i32 = arith.constant 0 : i32
    %c0_i32_0 = arith.constant 0 : i32
    %c0_i32_1 = arith.constant 0 : i32
    return %c0_i32, %c0_i32_0 : i32, i32
  }
  func.func @transform_2(%arg0: i32) -> (i32, i32) {
    %c0_i32 = arith.constant 0 : i32
    %c0_i32_0 = arith.constant 0 : i32
    %c0_i32_1 = arith.constant 0 : i32
    return %c0_i32, %c0_i32_0 : i32, i32
  }
  func.func @transform_3(%arg0: i32) -> (i32, i32) {
    %c0_i32 = arith.constant 0 : i32
    %c0_i32_0 = arith.constant 0 : i32
    %c0_i32_1 = arith.constant 0 : i32
    return %c0_i32, %c0_i32_0 : i32, i32
  }
  func.func @transform_4(%arg0: i32) -> (i32, i32) {
    %c0_i32 = arith.constant 0 : i32
    %c0_i32_0 = arith.constant 0 : i32
    %c0_i32_1 = arith.constant 0 : i32
    return %c0_i32, %c0_i32_0 : i32, i32
  }
  func.func @transform_5(%arg0: i32) -> (i32, i32) {
    %c0_i32 = arith.constant 0 : i32
    %c0_i32_0 = arith.constant 0 : i32
    return %arg0, %c0_i32 : i32, i32
  }
}

</mosaic_0001>

<llo_original>
// kernel: tpu_custom_call.1
$region0: #{tpu_custom_call.1}
  #allocation0 [shape = 'u32[]', space=smem, size = 0x4, offset = 0x4, fixed_abs, tag = 'smem constant byte address 0x4 - core index']
  #allocation1 [shape = 'u32[144,128]{1,0:T(1,128)}', space=vmem, size = 0x12000, scoped, tag = 'internal scratch']
  %s0 = inlined_call_operand.hbm [shape: f32[16,32], index: 0, kind: input, shape index: {}]
  %s1 = inlined_call_operand.hbm [shape: f32[32,128], index: 1, kind: input, shape index: {}]
  %s2 = inlined_call_operand.vmem [shape: f32[1,128], index: 2, kind: input, shape index: {}]
  %s3 = inlined_call_operand.hbm [shape: f32[128,256], index: 3, kind: input, shape index: {}]
  %s4 = inlined_call_operand.vmem [shape: f32[1,256], index: 4, kind: input, shape index: {}]
  %s5 = inlined_call_operand.hbm [shape: f32[16,128], index: 5, kind: output, shape index: {}]
  %s6 = sld [smem:[#allocation0]]
  $region42: #{tpu_custom_call.1} parent=0
    _
  %s8 = ssub.s32 1, %s6
  %s9 = scalar_select 0, %s8, %s6
  $region1: #{tpu_custom_call.1} parent=0
    #allocation2 [shape = 'u8[8192]{0}', space=vmem, size = 0x2000, scoped, tag = 'input window, operand 0, single buffered']
    #allocation3 [shape = 's32[1]{0}', space=sflag, size = 0x4, scoped, tag = 'scoped memory for tpu_custom_call.1']
    #allocation4 [shape = 's32[1]{0}', space=sflag, size = 0x4, scoped, tag = 'scoped memory for tpu_custom_call.1']
    #allocation5 [shape = 'u8[16384]{0}', space=vmem, size = 0x4000, scoped, tag = 'input window, operand 1, single buffered']
    #allocation6 [shape = 's32[1]{0}', space=sflag, size = 0x4, scoped, tag = 'scoped memory for tpu_custom_call.1']
    #allocation7 [shape = 'u8[131072]{0}', space=vmem, size = 0x20000, scoped, tag = 'input window, operand 3, single buffered']
    #allocation8 [shape = 'u8[8192]{0}', space=vmem, size = 0x2000, scoped, tag = 'output window, operand 0, single buffered']
    %10 = vsyncpa [#allocation3], 0
    %11 = vsyncpa [#allocation6], 0
    %12 = vsyncpa [#allocation4], 0
    // Predicated region
    $region2: #{tpu_custom_call.1} parent=1 // pred_check
      _
    $region3: #{tpu_custom_call.1} parent=1 // pred_check_branch
      %14 = sbr.rel (0) target = $region5
    $region4: #{tpu_custom_call.1} parent=1 // pred_region
      %s16 = ssub.s32 256, 256
      %17 = vsyncadd [#allocation3], %s16
      %s18 = sshll.u32 [#allocation2], 4
      %s19 = int_to_ptr.vmem [resolvable:$true] %s18
      %24 = dma.hbm_to_vmem [thread:$0]  %s0, 256, %s19, [#allocation3], 128, 128, 8
    $region5: #{tpu_custom_call.1} parent=1 // pred_fallthru
      _
    // Predicated region
    $region6: #{tpu_custom_call.1} parent=1 // pred_check
      _
    $region7: #{tpu_custom_call.1} parent=1 // pred_check_branch
      %26 = sbr.rel (0) target = $region9
    $region8: #{tpu_custom_call.1} parent=1 // pred_region
      %s28 = ssub.s32 512, 512
      %29 = vsyncadd [#allocation6], %s28
      %s30 = sshll.u32 [#allocation5], 4
      %s31 = int_to_ptr.vmem [resolvable:$true] %s30
      %36 = dma.hbm_to_vmem [thread:$0]  %s1, 512, %s31, [#allocation6], 128, 128, 8
    $region9: #{tpu_custom_call.1} parent=1 // pred_fallthru
      _
    // Predicated region
    $region10: #{tpu_custom_call.1} parent=1 // pred_check
      _
    $region11: #{tpu_custom_call.1} parent=1 // pred_check_branch
      %38 = sbr.rel (0) target = $region13
    $region12: #{tpu_custom_call.1} parent=1 // pred_region
      _
    $region13: #{tpu_custom_call.1} parent=1 // pred_fallthru
      _
    // Predicated region
    $region14: #{tpu_custom_call.1} parent=1 // pred_check
      _
    $region15: #{tpu_custom_call.1} parent=1 // pred_check_branch
      %40 = sbr.rel (0) target = $region17
    $region16: #{tpu_custom_call.1} parent=1 // pred_region
      %s42 = ssub.s32 4096, 4096
      %43 = vsyncadd [#allocation6], %s42
      %s44 = sshll.u32 [#allocation7], 4
      %s45 = int_to_ptr.vmem [resolvable:$true] %s44
      %50 = dma.hbm_to_vmem [thread:$0]  %s3, 4096, %s45, [#allocation6], 256, 256, 16
    $region17: #{tpu_custom_call.1} parent=1 // pred_fallthru
      _
    // Predicated region
    $region18: #{tpu_custom_call.1} parent=1 // pred_check
      _
    $region19: #{tpu_custom_call.1} parent=1 // pred_check_branch
      %52 = sbr.rel (0) target = $region21
    $region20: #{tpu_custom_call.1} parent=1 // pred_region
      _
    $region21: #{tpu_custom_call.1} parent=1 // pred_fallthru
      _
    // Predicated region
    $region22: #{tpu_custom_call.1} parent=1 // pred_check
      _
    $region23: #{tpu_custom_call.1} parent=1 // pred_check_branch
      %54 = sbr.rel (0) target = $region25
    $region24: #{tpu_custom_call.1} parent=1 // pred_region
      %55 = dma.done [#allocation3], 256
    $region25: #{tpu_custom_call.1} parent=1 // pred_fallthru
      _
    // Predicated region
    $region26: #{tpu_custom_call.1} parent=1 // pred_check
      _
    $region27: #{tpu_custom_call.1} parent=1 // pred_check_branch
      %57 = sbr.rel (0) target = $region29
    $region28: #{tpu_custom_call.1} parent=1 // pred_region
      %58 = dma.done [#allocation6], 512
    $region29: #{tpu_custom_call.1} parent=1 // pred_fallthru
      _
    // Predicated region
    $region30: #{tpu_custom_call.1} parent=1 // pred_check
      _
    $region31: #{tpu_custom_call.1} parent=1 // pred_check_branch
      %60 = sbr.rel (0) target = $region33
    $region32: #{tpu_custom_call.1} parent=1 // pred_region
      %61 = dma.done [#allocation6], 4096
    $region33: #{tpu_custom_call.1} parent=1 // pred_fallthru
      _
    %v62 = vld [vmem:[#allocation2] sm:$0xff]
    %v63 = vld [vmem:[#allocation2 + $0x8] sm:$0xff]
    %v64 = vld [vmem:[#allocation5] sm:$0xff]
    %v65 = vld [vmem:[#allocation5 + $0x8] sm:$0xff]
    %v66 = vld [vmem:[#allocation5 + $0x10] sm:$0xff]
    %v67 = vld [vmem:[#allocation5 + $0x18] sm:$0xff]
    %v68 = vld [vmem:[%s2] sm:$0x1]
    %v70 = vlaneseq
    %v71 = vshrl.u32 %v70, 7
    %v72 = vsub.s32 0, %v71
    %v73 = vrot.slane %v68, %v72
    %vm75 = vcmask 261120
    %v77 = vsel %vm75, %v62, 0
    %v80 = vsel %vm75, %v63, 0
    %82 = vmatprep.subr.mxu0 0.0
    %83 = vmatpush1.msra.mxu0 %v64
    %84 = vmatprep.subr.mxu0 0.0
    %85 = vmatpush1.msra.mxu0 %v65
    %86 = vmatprep.subr.mxu0 0.0
    %87 = vmatpush1.msra.mxu0 %v66
    %88 = vmatprep.subr.mxu0 0.0
    %89 = vmatpush1.msra.mxu0 %v67
    %90 = vmatprep.subr.mxu0 0.0
    %91 = vmatpush1.msra.mxu0 0.0
    %92 = vmatprep.subr.mxu0 0.0
    %93 = vmatpush1.msra.mxu0 0.0
    %94 = vmatprep.subr.mxu0 0.0
    %95 = vmatpush1.msra.mxu0 0.0
    %96 = vmatprep.subr.mxu0 0.0
    %97 = vmatpush1.msra.mxu0 0.0
    %98 = vmatprep.subr.mxu0 0.0
    %99 = vmatpush1.msra.mxu0 0.0
    %100 = vmatprep.subr.mxu0 0.0
    %101 = vmatpush1.msra.mxu0 0.0
    %102 = vmatprep.subr.mxu0 0.0
    %103 = vmatpush1.msra.mxu0 0.0
    %104 = vmatprep.subr.mxu0 0.0
    %105 = vmatpush1.msra.mxu0 0.0
    %106 = vmatprep.subr.mxu0 0.0
    %107 = vmatpush1.msra.mxu0 0.0
    %108 = vmatprep.subr.mxu0 0.0
    %109 = vmatpush1.msra.mxu0 0.0
    %110 = vmatprep.subr.mxu0 0.0
    %111 = vmatpush1.msra.mxu0 0.0
    %112 = vmatprep.subr.mxu0 0.0
    %113 = vmatpush1.msra.mxu0 0.0
    %114 = vmatprep.subr.mxu0 0.0
    %115 = vmatpush1.msra.mxu0 0.0
    %116 = vmatprep.subr.mxu0 0.0
    %117 = vmatpush1.msra.mxu0 0.0
    %118 = vmatprep.subr.mxu0 0.0
    %119 = vmatpush1.msra.mxu0 0.0
    %120 = vmatprep.subr.mxu0 0.0
    %121 = vmatpush1.msra.mxu0 0.0
    %122 = vmatprep.subr.mxu0 0.0
    %123 = vmatpush1.msra.mxu0 0.0
    %124 = vmatprep.subr.mxu0 0.0
    %125 = vmatpush1.msra.mxu0 0.0
    %126 = vmatprep.subr.mxu0 0.0
    %127 = vmatpush1.msra.mxu0 0.0
    %128 = vmatprep.subr.mxu0 0.0
    %129 = vmatpush1.msra.mxu0 0.0
    %130 = vmatprep.subr.mxu0 0.0
    %131 = vmatpush1.msra.mxu0 0.0
    %132 = vmatprep.subr.mxu0 0.0
    %133 = vmatpush1.msra.mxu0 0.0
    %134 = vmatprep.subr.mxu0 0.0
    %135 = vmatpush1.msra.mxu0 0.0
    %136 = vmatprep.subr.mxu0 0.0
    %137 = vmatpush1.msra.mxu0 0.0
    %138 = vmatprep.subr.mxu0 0.0
    %139 = vmatpush1.msra.mxu0 0.0
    %140 = vmatprep.subr.mxu0 0.0
    %141 = vmatpush1.msra.mxu0 0.0
    %142 = vmatprep.subr.mxu0 0.0
    %143 = vmatpush1.msra.mxu0 0.0
    %144 = vmatprep.subr.mxu0 0.0
    %145 = vmatpush1.msra.mxu0 0.0
    %146 = vmatprep.mubr.f32.mxu0 0.0
    %147 = vmatmul.mubr.f32.gmra.mrb[0].mxu0 %v77
    %v148 = vpop.f32.mrb[0].mxu0
    %v149 = vadd.f32 %v73, %v148
    %v150 = vpop.f32.mrb[0].mxu0
    %151 = vmatprep.mubr.f32.mxu0 0.0
    %152 = vmatmul.mubr.f32.gmra.mrb[0].mxu0 %v80
    %v153 = vpop.f32.mrb[0].mxu0
    %v154 = vadd.f32 %v73, %v153
    %v155 = vpop.f32.mrb[0].mxu0
    %156 = vdwg.mxu0
    %v157 = vmax.f32 %v149, 0.0
    %v158 = vmax.f32 %v154, 0.0
    %v159 = vld [vmem:[#allocation7] sm:$0xff]
    %v160 = vld [vmem:[#allocation7 + $0x8] sm:$0xff]
    %v161 = vld [vmem:[#allocation7 + $0x10] sm:$0xff]
    %v162 = vld [vmem:[#allocation7 + $0x18] sm:$0xff]
    %v163 = vld [vmem:[#allocation7 + $0x20] sm:$0xff]
    %v164 = vld [vmem:[#allocation7 + $0x28] sm:$0xff]
    %v165 = vld [vmem:[#allocation7 + $0x30] sm:$0xff]
    %v166 = vld [vmem:[#allocation7 + $0x38] sm:$0xff]
    %v167 = vld [vmem:[#allocation7 + $0x40] sm:$0xff]
    %v168 = vld [vmem:[#allocation7 + $0x48] sm:$0xff]
    %v169 = vld [vmem:[#allocation7 + $0x50] sm:$0xff]
    %v170 = vld [vmem:[#allocation7 + $0x58] sm:$0xff]
    %v171 = vld [vmem:[#allocation7 + $0x60] sm:$0xff]
    %v172 = vld [vmem:[#allocation7 + $0x68] sm:$0xff]
    %v173 = vld [vmem:[#allocation7 + $0x70] sm:$0xff]
    %v174 = vld [vmem:[#allocation7 + $0x78] sm:$0xff]
    %v175 = vld [vmem:[#allocation7 + $0x80] sm:$0xff]
    %v176 = vld [vmem:[#allocation7 + $0x88] sm:$0xff]
    %v177 = vld [vmem:[#allocation7 + $0x90] sm:$0xff]
    %v178 = vld [vmem:[#allocation7 + $0x98] sm:$0xff]
    %v179 = vld [vmem:[#allocation7 + $0xa0] sm:$0xff]
    %v180 = vld [vmem:[#allocation7 + $0xa8] sm:$0xff]
    %v181 = vld [vmem:[#allocation7 + $0xb0] sm:$0xff]
    %v182 = vld [vmem:[#allocation7 + $0xb8] sm:$0xff]
    %v183 = vld [vmem:[#allocation7 + $0xc0] sm:$0xff]
    %v184 = vld [vmem:[#allocation7 + $0xc8] sm:$0xff]
    %v185 = vld [vmem:[#allocation7 + $0xd0] sm:$0xff]
    %v186 = vld [vmem:[#allocation7 + $0xd8] sm:$0xff]
    %v187 = vld [vmem:[#allocation7 + $0xe0] sm:$0xff]
    %v188 = vld [vmem:[#allocation7 + $0xe8] sm:$0xff]
    %v189 = vld [vmem:[#allocation7 + $0xf0] sm:$0xff]
    %v190 = vld [vmem:[#allocation7 + $0xf8] sm:$0xff]
    %v191 = vld [vmem:[%s4] sm:$0x3]
    %v193 = vlaneseq
    %v194 = vshrl.u32 %v193, 7
    %v195 = vsub.s32 0, %v194
    %v196 = vrot.slane %v191, %v195
    %v197 = vlaneseq
    %v198 = vshrl.u32 %v197, 7
    %v199 = vsub.s32 1, %v198
    %v200 = vrot.slane %v191, %v199
    %203 = vmatprep.subr.mxu0 %v160
    %204 = vmatpush1.msra.mxu0 %v159
    %205 = vmatprep.subr.mxu0 %v162
    %206 = vmatpush1.msra.mxu0 %v161
    %207 = vmatprep.subr.mxu0 %v164
    %208 = vmatpush1.msra.mxu0 %v163
    %209 = vmatprep.subr.mxu0 %v166
    %210 = vmatpush1.msra.mxu0 %v165
    %211 = vmatprep.subr.mxu0 %v168
    %212 = vmatpush1.msra.mxu0 %v167
    %213 = vmatprep.subr.mxu0 %v170
    %214 = vmatpush1.msra.mxu0 %v169
    %215 = vmatprep.subr.mxu0 %v172
    %216 = vmatpush1.msra.mxu0 %v171
    %217 = vmatprep.subr.mxu0 %v174
    %218 = vmatpush1.msra.mxu0 %v173
    %219 = vmatprep.subr.mxu0 %v176
    %220 = vmatpush1.msra.mxu0 %v175
    %221 = vmatprep.subr.mxu0 %v178
    %222 = vmatpush1.msra.mxu0 %v177
    %223 = vmatprep.subr.mxu0 %v180
    %224 = vmatpush1.msra.mxu0 %v179
    %225 = vmatprep.subr.mxu0 %v182
    %226 = vmatpush1.msra.mxu0 %v181
    %227 = vmatprep.subr.mxu0 %v184
    %228 = vmatpush1.msra.mxu0 %v183
    %229 = vmatprep.subr.mxu0 %v186
    %230 = vmatpush1.msra.mxu0 %v185
    %231 = vmatprep.subr.mxu0 %v188
    %232 = vmatpush1.msra.mxu0 %v187
    %233 = vmatprep.subr.mxu0 %v190
    %234 = vmatpush1.msra.mxu0 %v189
    %235 = vmatprep.subr.mxu0 0.0
    %236 = vmatpush1.msra.mxu0 0.0
    %237 = vmatprep.subr.mxu0 0.0
    %238 = vmatpush1.msra.mxu0 0.0
    %239 = vmatprep.subr.mxu0 0.0
    %240 = vmatpush1.msra.mxu0 0.0
    %241 = vmatprep.subr.mxu0 0.0
    %242 = vmatpush1.msra.mxu0 0.0
    %243 = vmatprep.subr.mxu0 0.0
    %244 = vmatpush1.msra.mxu0 0.0
    %245 = vmatprep.subr.mxu0 0.0
    %246 = vmatpush1.msra.mxu0 0.0
    %247 = vmatprep.subr.mxu0 0.0
    %248 = vmatpush1.msra.mxu0 0.0
    %249 = vmatprep.subr.mxu0 0.0
    %250 = vmatpush1.msra.mxu0 0.0
    %251 = vmatprep.subr.mxu0 0.0
    %252 = vmatpush1.msra.mxu0 0.0
    %253 = vmatprep.subr.mxu0 0.0
    %254 = vmatpush1.msra.mxu0 0.0
    %255 = vmatprep.subr.mxu0 0.0
    %256 = vmatpush1.msra.mxu0 0.0
    %257 = vmatprep.subr.mxu0 0.0
    %258 = vmatpush1.msra.mxu0 0.0
    %259 = vmatprep.subr.mxu0 0.0
    %260 = vmatpush1.msra.mxu0 0.0
    %261 = vmatprep.subr.mxu0 0.0
    %262 = vmatpush1.msra.mxu0 0.0
    %263 = vmatprep.subr.mxu0 0.0
    %264 = vmatpush1.msra.mxu0 0.0
    %265 = vmatprep.subr.mxu0 0.0
    %266 = vmatpush1.msra.mxu0 0.0
    %267 = vmatprep.mubr.f32.mxu0 0.0
    %268 = vmatmul.mubr.f32.gmra.mrb[0].mxu0 %v157
    %v269 = vpop.f32.mrb[0].mxu0
    %v270 = vadd.f32 %v196, %v269
    %v271 = vpop.f32.mrb[0].mxu0
    %v272 = vadd.f32 %v200, %v271
    %273 = vmatprep.mubr.f32.mxu0 0.0
    %274 = vmatmul.mubr.f32.gmra.mrb[0].mxu0 %v158
    %v275 = vpop.f32.mrb[0].mxu0
    %v276 = vadd.f32 %v196, %v275
    %v277 = vpop.f32.mrb[0].mxu0
    %v278 = vadd.f32 %v200, %v277
    %279 = vdwg.mxu0
    %v280 = vtanh.pop %v270
    %v281 = vtanh.pop %v276
    %282 = vadd.xlane.f32.xlu0 %v272
    %v283 = vpop.xlane.xlu0 %282
    %284 = vadd.xlane.f32.xlu0 %v278
    %v285 = vpop.xlane.xlu0 %284
    %v286 = vxor.u32 %v283, 2147483648
    %v287 = vxor.u32 %v285, 2147483648
    %v288 = vmul.f32 %v286, 1.442695
    %v289 = vpow.pop %v288
    %v290 = vmul.f32 %v287, 1.442695
    %v291 = vpow.pop %v290
    %v292 = vadd.f32 %v289, 1.0
    %v293 = vadd.f32 %v291, 1.0
    %v294 = vrcp.pop %v292
    %v295 = vmul.f32 1.0, %v294
    %v296 = vrcp.pop %v293
    %v297 = vmul.f32 1.0, %v296
    %v298 = vmul.f32 %v295, %v280
    %v299 = vmul.f32 %v297, %v281
    %v300 = vsub.f32 1.0, %v295
    %v301 = vsub.f32 1.0, %v297
    %v302 = vmul.f32 %v300, %v157
    %v303 = vmul.f32 %v301, %v158
    %v304 = vadd.f32 %v298, %v302
    %v305 = vadd.f32 %v299, %v303
    %306 = vst [vmem:[#allocation8] sm:$0xff] %v304
    %307 = vst [vmem:[#allocation8 + $0x8] sm:$0xff] %v305
    // Predicated region
    $region34: #{tpu_custom_call.1} parent=1 // pred_check
      _
    $region35: #{tpu_custom_call.1} parent=1 // pred_check_branch
      %309 = sbr.rel (0) target = $region37
    $region36: #{tpu_custom_call.1} parent=1 // pred_region
      %s311 = ssub.s32 256, 256
      %312 = vsyncadd [#allocation4], %s311
      %s313 = sshll.u32 [#allocation8], 4
      %s314 = int_to_ptr.vmem [resolvable:$true] %s313
      %319 = dma.vmem_to_hbm [thread:$0]  %s314, 256, %s5, [#allocation4], 128, 128, 8
    $region37: #{tpu_custom_call.1} parent=1 // pred_fallthru
      _
    // Predicated region
    $region38: #{tpu_custom_call.1} parent=1 // pred_check
      _
    $region39: #{tpu_custom_call.1} parent=1 // pred_check_branch
      %321 = sbr.rel (0) target = $region41
    $region40: #{tpu_custom_call.1} parent=1 // pred_region
      %322 = dma.done [#allocation4], 256
    $region41: #{tpu_custom_call.1} parent=1 // pred_fallthru
      _
    %323 = vsyncpa [#allocation3], 1
    %324 = vsyncpa [#allocation6], 1
    %325 = vsyncpa [#allocation4], 1

// kernel: tpu_custom_call.1
$region0: #{tpu_custom_call.1}
  #allocation0 [shape = 'u32[]', space=smem, size = 0x4, offset = 0x4, fixed_abs, tag = 'smem constant byte address 0x4 - core index']
  #allocation1 [shape = 'u32[144,128]{1,0:T(1,128)}', space=vmem, size = 0x12000, scoped, tag = 'internal scratch']
  %s0 = inlined_call_operand.hbm [shape: f32[16,32], index: 0, kind: input, shape index: {}]
  %s1 = inlined_call_operand.hbm [shape: f32[32,128], index: 1, kind: input, shape index: {}]
  %s2 = inlined_call_operand.vmem [shape: f32[1,128], index: 2, kind: input, shape index: {}]
  %s3 = inlined_call_operand.hbm [shape: f32[128,256], index: 3, kind: input, shape index: {}]
  %s4 = inlined_call_operand.vmem [shape: f32[1,256], index: 4, kind: input, shape index: {}]
  %s5 = inlined_call_operand.hbm [shape: f32[16,128], index: 5, kind: output, shape index: {}]
  %s6 = sld [smem:[#allocation0]]
  $region42: #{tpu_custom_call.1} parent=0
    _
  %s8 = ssub.s32 1, %s6
  %s9 = scalar_select 0, %s8, %s6
  $region1: #{tpu_custom_call.1} parent=0
    #allocation2 [shape = 'u8[8192]{0}', space=vmem, size = 0x2000, scoped, tag = 'input window, operand 0, single buffered']
    #allocation3 [shape = 's32[1]{0}', space=sflag, size = 0x4, scoped, tag = 'scoped memory for tpu_custom_call.1']
    #allocation4 [shape = 's32[1]{0}', space=sflag, size = 0x4, scoped, tag = 'scoped memory for tpu_custom_call.1']
    #allocation5 [shape = 'u8[16384]{0}', space=vmem, size = 0x4000, scoped, tag = 'input window, operand 1, single buffered']
    #allocation6 [shape = 's32[1]{0}', space=sflag, size = 0x4, scoped, tag = 'scoped memory for tpu_custom_call.1']
    #allocation7 [shape = 'u8[131072]{0}', space=vmem, size = 0x20000, scoped, tag = 'input window, operand 3, single buffered']
    #allocation8 [shape = 'u8[8192]{0}', space=vmem, size = 0x2000, scoped, tag = 'output window, operand 0, single buffered']
    %10 = vsyncpa [#allocation3], 0
    %11 = vsyncpa [#allocation6], 0
    %12 = vsyncpa [#allocation4], 0
    // Predicated region
    $region2: #{tpu_custom_call.1} parent=1 // pred_check
      _
    $region3: #{tpu_custom_call.1} parent=1 // pred_check_branch
      %14 = sbr.rel (0) target = $region5
    $region4: #{tpu_custom_call.1} parent=1 // pred_region
      %s16 = ssub.s32 256, 256
      %17 = vsyncadd [#allocation3], %s16
      %s18 = sshll.u32 [#allocation2], 4
      %s19 = int_to_ptr.vmem [resolvable:$true] %s18
      %24 = dma.hbm_to_vmem [thread:$0]  %s0, 256, %s19, [#allocation3], 128, 128, 8
    $region5: #{tpu_custom_call.1} parent=1 // pred_fallthru
      _
    // Predicated region
    $region6: #{tpu_custom_call.1} parent=1 // pred_check
      _
    $region7: #{tpu_custom_call.1} parent=1 // pred_check_branch
      %26 = sbr.rel (0) target = $region9
    $region8: #{tpu_custom_call.1} parent=1 // pred_region
      %s28 = ssub.s32 512, 512
      %29 = vsyncadd [#allocation6], %s28
      %s30 = sshll.u32 [#allocation5], 4
      %s31 = int_to_ptr.vmem [resolvable:$true] %s30
      %36 = dma.hbm_to_vmem [thread:$0]  %s1, 512, %s31, [#allocation6], 128, 128, 8
    $region9: #{tpu_custom_call.1} parent=1 // pred_fallthru
      _
    // Predicated region
    $region10: #{tpu_custom_call.1} parent=1 // pred_check
      _
    $region11: #{tpu_custom_call.1} parent=1 // pred_check_branch
      %38 = sbr.rel (0) target = $region13
    $region12: #{tpu_custom_call.1} parent=1 // pred_region
      _
    $region13: #{tpu_custom_call.1} parent=1 // pred_fallthru
      _
    // Predicated region
    $region14: #{tpu_custom_call.1} parent=1 // pred_check
      _
    $region15: #{tpu_custom_call.1} parent=1 // pred_check_branch
      %40 = sbr.rel (0) target = $region17
    $region16: #{tpu_custom_call.1} parent=1 // pred_region
      %s42 = ssub.s32 4096, 4096
      %43 = vsyncadd [#allocation6], %s42
      %s44 = sshll.u32 [#allocation7], 4
      %s45 = int_to_ptr.vmem [resolvable:$true] %s44
      %50 = dma.hbm_to_vmem [thread:$0]  %s3, 4096, %s45, [#allocation6], 256, 256, 16
    $region17: #{tpu_custom_call.1} parent=1 // pred_fallthru
      _
    // Predicated region
    $region18: #{tpu_custom_call.1} parent=1 // pred_check
      _
    $region19: #{tpu_custom_call.1} parent=1 // pred_check_branch
      %52 = sbr.rel (0) target = $region21
    $region20: #{tpu_custom_call.1} parent=1 // pred_region
      _
    $region21: #{tpu_custom_call.1} parent=1 // pred_fallthru
      _
    // Predicated region
    $region22: #{tpu_custom_call.1} parent=1 // pred_check
      _
    $region23: #{tpu_custom_call.1} parent=1 // pred_check_branch
      %54 = sbr.rel (0) target = $region25
    $region24: #{tpu_custom_call.1} parent=1 // pred_region
      %55 = dma.done [#allocation3], 256
    $region25: #{tpu_custom_call.1} parent=1 // pred_fallthru
      _
    // Predicated region
    $region26: #{tpu_custom_call.1} parent=1 // pred_check
      _
    $region27: #{tpu_custom_call.1} parent=1 // pred_check_branch
      %57 = sbr.rel (0) target = $region29
    $region28: #{tpu_custom_call.1} parent=1 // pred_region
      %58 = dma.done [#allocation6], 512
    $region29: #{tpu_custom_call.1} parent=1 // pred_fallthru
      _
    // Predicated region
    $region30: #{tpu_custom_call.1} parent=1 // pred_check
      _
    $region31: #{tpu_custom_call.1} parent=1 // pred_check_branch
      %60 = sbr.rel (0) target = $region33
    $region32: #{tpu_custom_call.1} parent=1 // pred_region
      %61 = dma.done [#allocation6], 4096
    $region33: #{tpu_custom_call.1} parent=1 // pred_fallthru
      _
    %v62 = vld [vmem:[#allocation2] sm:$0xff]
    %v63 = vld [vmem:[#allocation2 + $0x8] sm:$0xff]
    %v64 = vld [vmem:[#allocation5] sm:$0xff]
    %v65 = vld [vmem:[#allocation5 + $0x8] sm:$0xff]
    %v66 = vld [vmem:[#allocation5 + $0x10] sm:$0xff]
    %v67 = vld [vmem:[#allocation5 + $0x18] sm:$0xff]
    %v68 = vld [vmem:[%s2] sm:$0x1]
    %v70 = vlaneseq
    %v71 = vshrl.u32 %v70, 7
    %v72 = vsub.s32 0, %v71
    %v73 = vrot.slane %v68, %v72
    %vm75 = vcmask 261120
    %v77 = vsel %vm75, %v62, 0
    %v80 = vsel %vm75, %v63, 0
    %82 = vmatprep.subr.mxu0 0.0
    %83 = vmatpush1.msra.mxu0 %v64
    %84 = vmatprep.subr.mxu0 0.0
    %85 = vmatpush1.msra.mxu0 %v65
    %86 = vmatprep.subr.mxu0 0.0
    %87 = vmatpush1.msra.mxu0 %v66
    %88 = vmatprep.subr.mxu0 0.0
    %89 = vmatpush1.msra.mxu0 %v67
    %90 = vmatprep.subr.mxu0 0.0
    %91 = vmatpush1.msra.mxu0 0.0
    %92 = vmatprep.subr.mxu0 0.0
    %93 = vmatpush1.msra.mxu0 0.0
    %94 = vmatprep.subr.mxu0 0.0
    %95 = vmatpush1.msra.mxu0 0.0
    %96 = vmatprep.subr.mxu0 0.0
    %97 = vmatpush1.msra.mxu0 0.0
    %98 = vmatprep.subr.mxu0 0.0
    %99 = vmatpush1.msra.mxu0 0.0
    %100 = vmatprep.subr.mxu0 0.0
    %101 = vmatpush1.msra.mxu0 0.0
    %102 = vmatprep.subr.mxu0 0.0
    %103 = vmatpush1.msra.mxu0 0.0
    %104 = vmatprep.subr.mxu0 0.0
    %105 = vmatpush1.msra.mxu0 0.0
    %106 = vmatprep.subr.mxu0 0.0
    %107 = vmatpush1.msra.mxu0 0.0
    %108 = vmatprep.subr.mxu0 0.0
    %109 = vmatpush1.msra.mxu0 0.0
    %110 = vmatprep.subr.mxu0 0.0
    %111 = vmatpush1.msra.mxu0 0.0
    %112 = vmatprep.subr.mxu0 0.0
    %113 = vmatpush1.msra.mxu0 0.0
    %114 = vmatprep.subr.mxu0 0.0
    %115 = vmatpush1.msra.mxu0 0.0
    %116 = vmatprep.subr.mxu0 0.0
    %117 = vmatpush1.msra.mxu0 0.0
    %118 = vmatprep.subr.mxu0 0.0
    %119 = vmatpush1.msra.mxu0 0.0
    %120 = vmatprep.subr.mxu0 0.0
    %121 = vmatpush1.msra.mxu0 0.0
    %122 = vmatprep.subr.mxu0 0.0
    %123 = vmatpush1.msra.mxu0 0.0
    %124 = vmatprep.subr.mxu0 0.0
    %125 = vmatpush1.msra.mxu0 0.0
    %126 = vmatprep.subr.mxu0 0.0
    %127 = vmatpush1.msra.mxu0 0.0
    %128 = vmatprep.subr.mxu0 0.0
    %129 = vmatpush1.msra.mxu0 0.0
    %130 = vmatprep.subr.mxu0 0.0
    %131 = vmatpush1.msra.mxu0 0.0
    %132 = vmatprep.subr.mxu0 0.0
    %133 = vmatpush1.msra.mxu0 0.0
    %134 = vmatprep.subr.mxu0 0.0
    %135 = vmatpush1.msra.mxu0 0.0
    %136 = vmatprep.subr.mxu0 0.0
    %137 = vmatpush1.msra.mxu0 0.0
    %138 = vmatprep.subr.mxu0 0.0
    %139 = vmatpush1.msra.mxu0 0.0
    %140 = vmatprep.subr.mxu0 0.0
    %141 = vmatpush1.msra.mxu0 0.0
    %142 = vmatprep.subr.mxu0 0.0
    %143 = vmatpush1.msra.mxu0 0.0
    %144 = vmatprep.subr.mxu0 0.0
    %145 = vmatpush1.msra.mxu0 0.0
    %146 = vmatprep.mubr.f32.mxu0 0.0
    %147 = vmatmul.mubr.f32.gmra.mrb[0].mxu0 %v77
    %v148 = vpop.f32.mrb[0].mxu0
    %v149 = vadd.f32 %v73, %v148
    %v150 = vpop.f32.mrb[0].mxu0
    %151 = vmatprep.mubr.f32.mxu0 0.0
    %152 = vmatmul.mubr.f32.gmra.mrb[0].mxu0 %v80
    %v153 = vpop.f32.mrb[0].mxu0
    %v154 = vadd.f32 %v73, %v153
    %v155 = vpop.f32.mrb[0].mxu0
    %156 = vdwg.mxu0
    %v157 = vmax.f32 %v149, 0.0
    %v158 = vmax.f32 %v154, 0.0
    %v159 = vld [vmem:[#allocation7] sm:$0xff]
    %v160 = vld [vmem:[#allocation7 + $0x8] sm:$0xff]
    %v161 = vld [vmem:[#allocation7 + $0x10] sm:$0xff]
    %v162 = vld [vmem:[#allocation7 + $0x18] sm:$0xff]
    %v163 = vld [vmem:[#allocation7 + $0x20] sm:$0xff]
    %v164 = vld [vmem:[#allocation7 + $0x28] sm:$0xff]
    %v165 = vld [vmem:[#allocation7 + $0x30] sm:$0xff]
    %v166 = vld [vmem:[#allocation7 + $0x38] sm:$0xff]
    %v167 = vld [vmem:[#allocation7 + $0x40] sm:$0xff]
    %v168 = vld [vmem:[#allocation7 + $0x48] sm:$0xff]
    %v169 = vld [vmem:[#allocation7 + $0x50] sm:$0xff]
    %v170 = vld [vmem:[#allocation7 + $0x58] sm:$0xff]
    %v171 = vld [vmem:[#allocation7 + $0x60] sm:$0xff]
    %v172 = vld [vmem:[#allocation7 + $0x68] sm:$0xff]
    %v173 = vld [vmem:[#allocation7 + $0x70] sm:$0xff]
    %v174 = vld [vmem:[#allocation7 + $0x78] sm:$0xff]
    %v175 = vld [vmem:[#allocation7 + $0x80] sm:$0xff]
    %v176 = vld [vmem:[#allocation7 + $0x88] sm:$0xff]
    %v177 = vld [vmem:[#allocation7 + $0x90] sm:$0xff]
    %v178 = vld [vmem:[#allocation7 + $0x98] sm:$0xff]
    %v179 = vld [vmem:[#allocation7 + $0xa0] sm:$0xff]
    %v180 = vld [vmem:[#allocation7 + $0xa8] sm:$0xff]
    %v181 = vld [vmem:[#allocation7 + $0xb0] sm:$0xff]
    %v182 = vld [vmem:[#allocation7 + $0xb8] sm:$0xff]
    %v183 = vld [vmem:[#allocation7 + $0xc0] sm:$0xff]
    %v184 = vld [vmem:[#allocation7 + $0xc8] sm:$0xff]
    %v185 = vld [vmem:[#allocation7 + $0xd0] sm:$0xff]
    %v186 = vld [vmem:[#allocation7 + $0xd8] sm:$0xff]
    %v187 = vld [vmem:[#allocation7 + $0xe0] sm:$0xff]
    %v188 = vld [vmem:[#allocation7 + $0xe8] sm:$0xff]
    %v189 = vld [vmem:[#allocation7 + $0xf0] sm:$0xff]
    %v190 = vld [vmem:[#allocation7 + $0xf8] sm:$0xff]
    %v191 = vld [vmem:[%s4] sm:$0x3]
    %v193 = vlaneseq
    %v194 = vshrl.u32 %v193, 7
    %v195 = vsub.s32 0, %v194
    %v196 = vrot.slane %v191, %v195
    %v197 = vlaneseq
    %v198 = vshrl.u32 %v197, 7
    %v199 = vsub.s32 1, %v198
    %v200 = vrot.slane %v191, %v199
    %203 = vmatprep.subr.mxu0 %v160
    %204 = vmatpush1.msra.mxu0 %v159
    %205 = vmatprep.subr.mxu0 %v162
    %206 = vmatpush1.msra.mxu0 %v161
    %207 = vmatprep.subr.mxu0 %v164
    %208 = vmatpush1.msra.mxu0 %v163
    %209 = vmatprep.subr.mxu0 %v166
    %210 = vmatpush1.msra.mxu0 %v165
    %211 = vmatprep.subr.mxu0 %v168
    %212 = vmatpush1.msra.mxu0 %v167
    %213 = vmatprep.subr.mxu0 %v170
    %214 = vmatpush1.msra.mxu0 %v169
    %215 = vmatprep.subr.mxu0 %v172
    %216 = vmatpush1.msra.mxu0 %v171
    %217 = vmatprep.subr.mxu0 %v174
    %218 = vmatpush1.msra.mxu0 %v173
    %219 = vmatprep.subr.mxu0 %v176
    %220 = vmatpush1.msra.mxu0 %v175
    %221 = vmatprep.subr.mxu0 %v178
    %222 = vmatpush1.msra.mxu0 %v177
    %223 = vmatprep.subr.mxu0 %v180
    %224 = vmatpush1.msra.mxu0 %v179
    %225 = vmatprep.subr.mxu0 %v182
    %226 = vmatpush1.msra.mxu0 %v181
    %227 = vmatprep.subr.mxu0 %v184
    %228 = vmatpush1.msra.mxu0 %v183
    %229 = vmatprep.subr.mxu0 %v186
    %230 = vmatpush1.msra.mxu0 %v185
    %231 = vmatprep.subr.mxu0 %v188
    %232 = vmatpush1.msra.mxu0 %v187
    %233 = vmatprep.subr.mxu0 %v190
    %234 = vmatpush1.msra.mxu0 %v189
    %235 = vmatprep.subr.mxu0 0.0
    %236 = vmatpush1.msra.mxu0 0.0
    %237 = vmatprep.subr.mxu0 0.0
    %238 = vmatpush1.msra.mxu0 0.0
    %239 = vmatprep.subr.mxu0 0.0
    %240 = vmatpush1.msra.mxu0 0.0
    %241 = vmatprep.subr.mxu0 0.0
    %242 = vmatpush1.msra.mxu0 0.0
    %243 = vmatprep.subr.mxu0 0.0
    %244 = vmatpush1.msra.mxu0 0.0
    %245 = vmatprep.subr.mxu0 0.0
    %246 = vmatpush1.msra.mxu0 0.0
    %247 = vmatprep.subr.mxu0 0.0
    %248 = vmatpush1.msra.mxu0 0.0
    %249 = vmatprep.subr.mxu0 0.0
    %250 = vmatpush1.msra.mxu0 0.0
    %251 = vmatprep.subr.mxu0 0.0
    %252 = vmatpush1.msra.mxu0 0.0
    %253 = vmatprep.subr.mxu0 0.0
    %254 = vmatpush1.msra.mxu0 0.0
    %255 = vmatprep.subr.mxu0 0.0
    %256 = vmatpush1.msra.mxu0 0.0
    %257 = vmatprep.subr.mxu0 0.0
    %258 = vmatpush1.msra.mxu0 0.0
    %259 = vmatprep.subr.mxu0 0.0
    %260 = vmatpush1.msra.mxu0 0.0
    %261 = vmatprep.subr.mxu0 0.0
    %262 = vmatpush1.msra.mxu0 0.0
    %263 = vmatprep.subr.mxu0 0.0
    %264 = vmatpush1.msra.mxu0 0.0
    %265 = vmatprep.subr.mxu0 0.0
    %266 = vmatpush1.msra.mxu0 0.0
    %267 = vmatprep.mubr.f32.mxu0 0.0
    %268 = vmatmul.mubr.f32.gmra.mrb[0].mxu0 %v157
    %v269 = vpop.f32.mrb[0].mxu0
    %v270 = vadd.f32 %v196, %v269
    %v271 = vpop.f32.mrb[0].mxu0
    %v272 = vadd.f32 %v200, %v271
    %273 = vmatprep.mubr.f32.mxu0 0.0
    %274 = vmatmul.mubr.f32.gmra.mrb[0].mxu0 %v158
    %v275 = vpop.f32.mrb[0].mxu0
    %v276 = vadd.f32 %v196, %v275
    %v277 = vpop.f32.mrb[0].mxu0
    %v278 = vadd.f32 %v200, %v277
    %279 = vdwg.mxu0
    %v280 = vtanh.pop %v270
    %v281 = vtanh.pop %v276
    %282 = vadd.xlane.f32.xlu0 %v272
    %v283 = vpop.xlane.xlu0 %282
    %284 = vadd.xlane.f32.xlu0 %v278
    %v285 = vpop.xlane.xlu0 %284
    %v286 = vxor.u32 %v283, 2147483648
    %v287 = vxor.u32 %v285, 2147483648
    %v288 = vmul.f32 %v286, 1.442695
    %v289 = vpow.pop %v288
    %v290 = vmul.f32 %v287, 1.442695
    %v291 = vpow.pop %v290
    %v292 = vadd.f32 %v289, 1.0
    %v293 = vadd.f32 %v291, 1.0
    %v294 = vrcp.pop %v292
    %v295 = vmul.f32 1.0, %v294
    %v296 = vrcp.pop %v293
    %v297 = vmul.f32 1.0, %v296
    %v298 = vmul.f32 %v295, %v280
    %v299 = vmul.f32 %v297, %v281
    %v300 = vsub.f32 1.0, %v295
    %v301 = vsub.f32 1.0, %v297
    %v302 = vmul.f32 %v300, %v157
    %v303 = vmul.f32 %v301, %v158
    %v304 = vadd.f32 %v298, %v302
    %v305 = vadd.f32 %v299, %v303
    %306 = vst [vmem:[#allocation8] sm:$0xff] %v304
    %307 = vst [vmem:[#allocation8 + $0x8] sm:$0xff] %v305
    // Predicated region
    $region34: #{tpu_custom_call.1} parent=1 // pred_check
      _
    $region35: #{tpu_custom_call.1} parent=1 // pred_check_branch
      %309 = sbr.rel (0) target = $region37
    $region36: #{tpu_custom_call.1} parent=1 // pred_region
      %s311 = ssub.s32 256, 256
      %312 = vsyncadd [#allocation4], %s311
      %s313 = sshll.u32 [#allocation8], 4
      %s314 = int_to_ptr.vmem [resolvable:$true] %s313
      %319 = dma.vmem_to_hbm [thread:$0]  %s314, 256, %s5, [#allocation4], 128, 128, 8
    $region37: #{tpu_custom_call.1} parent=1 // pred_fallthru
      _
    // Predicated region
    $region38: #{tpu_custom_call.1} parent=1 // pred_check
      _
    $region39: #{tpu_custom_call.1} parent=1 // pred_check_branch
      %321 = sbr.rel (0) target = $region41
    $region40: #{tpu_custom_call.1} parent=1 // pred_region
      %322 = dma.done [#allocation4], 256
    $region41: #{tpu_custom_call.1} parent=1 // pred_fallthru
      _
    %323 = vsyncpa [#allocation3], 1
    %324 = vsyncpa [#allocation6], 1
    %325 = vsyncpa [#allocation4], 1

</llo_original>
